<compile_context>
chip_gen: v6e
topology: v6e:2x2x1
jax: 0.10.0
libtpu: 0.0.40
codegen_flags: <defaults>
</compile_context>

<pallas_src>
import functools

import jax
import jax.numpy as jnp
from jax.experimental import pallas as pl
from jax.experimental.pallas import tpu as pltpu

EPS = 1e-12  # matches torch.nn.functional.normalize default


def _round_up(a: int, b: int) -> int:
    return ((a + b - 1) // b) * b


def _normed_linear_kernel(x_ref, w_ref, o_ref, *, compute_dtype):
    # x_ref: (tm, Kp), w_ref: (Kp, tn), o_ref: (tm, tn)
    x = x_ref[...].astype(jnp.float32)
    w = w_ref[...].astype(jnp.float32)

    # L2-normalize rows of x / columns of w with rsqrt (EUP) + multiply (VPU).
    # Clamping the sum of squares at EPS*EPS == clamping the norm at EPS.
    inv_x = jax.lax.rsqrt(
        jnp.maximum(jnp.sum(x * x, axis=1, keepdims=True), EPS * EPS)
    )
    inv_w = jax.lax.rsqrt(
        jnp.maximum(jnp.sum(w * w, axis=0, keepdims=True), EPS * EPS)
    )
    xn = (x * inv_x).astype(compute_dtype)
    wn = (w * inv_w).astype(compute_dtype)

    # Cosine-similarity matmul on the MXU, f32 accumulation.
    o_ref[...] = jnp.dot(xn, wn, preferred_element_type=jnp.float32).astype(
        o_ref.dtype
    )


def normed_linear(
    x: jax.Array,
    weight: jax.Array,
    *,
    tm_target: int = 256,
    tn_target: int = 512,
    compute_dtype=jnp.bfloat16,
) -> jax.Array:
    """out = normalize(x, dim=1) @ normalize(weight, dim=0)."""
    M, K = x.shape
    K2, N = weight.shape
    assert K == K2, (x.shape, weight.shape)

    # --- shape / tile selection -------------------------------------------
    # K stays un-tiled so per-block norms are complete (no accumulator pass),
    # but is padded to a multiple of 128 so the x-block is lane-dense and the
    # MXU contraction depth is aligned. Zero-padding does not change norms.
    Kp = _round_up(K, 128)
    tm = min(tm_target, _round_up(M, 8))        # sublane-aligned row tile
    tn = min(tn_target, _round_up(N, 128))      # lane-aligned column tile

    # Keep double-buffered f32 blocks within a conservative VMEM budget so the
    # same tile choice works on v7x (64 MiB VMEM, 32 MiB default scoped limit).
    budget = 24 * 1024 * 1024
    while 2 * 4 * (tm * Kp + Kp * tn + tm * tn) > budget:
        if tn > 128:
            tn = max(128, (tn // 2) // 128 * 128)
        elif tm > 8:
            tm = max(8, (tm // 2) // 8 * 8)
        else:
            break  # TODO(synk): tile K with an accumulator for very large K.

    Mp = _round_up(M, tm)
    Np = _round_up(N, tn)

    # Zero-pad (inert: zero rows/cols normalize to zero and contribute zero).
    if Mp != M or Kp != K:
        x = jnp.pad(x, ((0, Mp - M), (0, Kp - K)))
    if Kp != K or Np != N:
        weight = jnp.pad(weight, ((0, Kp - K), (0, Np - N)))

    grid = (Mp // tm, Np // tn)
    vmem_need = 2 * 4 * (tm * Kp + Kp * tn + tm * tn)
    vmem_limit = None
    if vmem_need > 16 * 1024 * 1024:
        vmem_limit = min(int(vmem_need * 5 // 4), 100 * 1024 * 1024)

    cost = pl.CostEstimate(
        flops=2 * Mp * Np * Kp,
        transcendentals=Mp + Np,  # the rsqrts
        bytes_accessed=4 * (Mp * Kp * grid[1] + Kp * Np * grid[0] + Mp * Np),
    )

    out = pl.pallas_call(
        functools.partial(_normed_linear_kernel, compute_dtype=compute_dtype),
        out_shape=jax.ShapeDtypeStruct((Mp, Np), jnp.float32),
        grid_spec=pltpu.PrefetchScalarGridSpec(
            num_scalar_prefetch=0,
            grid=grid,
            in_specs=[
                pl.BlockSpec((tm, Kp), lambda i, j: (i, 0)),
                pl.BlockSpec((Kp, tn), lambda i, j: (0, j)),
            ],
            out_specs=pl.BlockSpec((tm, tn), lambda i, j: (i, j)),
        ),
        compiler_params=pltpu.CompilerParams(
            dimension_semantics=("parallel", "parallel"),
            vmem_limit_bytes=vmem_limit,
        ),
        cost_estimate=cost,
    )(x, weight)

    if Mp != M or Np != N:
        out = out[:M, :N]
    return out


def init_normed_linear_weight(key, in_features: int, out_features: int):
    """Deterministic re-implementation of the PyTorch init:
    uniform_(-1, 1).renorm_(2, 1, 1e-05).mul_(100000.0)
    """
    w = jax.random.uniform(
        key, (in_features, out_features), minval=-1.0, maxval=1.0,
        dtype=jnp.float32,
    )
    col_norm = jnp.sqrt(jnp.sum(w * w, axis=0, keepdims=True))
    maxnorm = 1e-5
    scale = jnp.where(col_norm > maxnorm, maxnorm / (col_norm + 1e-7), 1.0)
    w = w * scale
    return w * 100000.0


def normed_linear_ref(x, weight):
    """Pure-JAX f32 reference."""
    xn = x / jnp.maximum(
        jnp.sqrt(jnp.sum(x * x, axis=1, keepdims=True)), EPS
    )
    wn = weight / jnp.maximum(
        jnp.sqrt(jnp.sum(weight * weight, axis=0, keepdims=True)), EPS
    )
    return xn @ wn


if __name__ == "__main__":
    key = jax.random.PRNGKey(0)
    k_x, k_w, k_x2, k_w2 = jax.random.split(key, 4)

    # Case 1: predictor-head-like shape from the SimSiam/CLD path.
    batch, in_features, out_features = 8, 32, 128
    x = jax.random.normal(k_x, (batch, in_features), dtype=jnp.float32)
    weight = init_normed_linear_weight(k_w, in_features, out_features)
    ref = normed_linear_ref(x, weight)

    # f32 MXU path: bit-tight semantics check.
    out_f32 = jax.block_until_ready(
        normed_linear(x, weight, compute_dtype=jnp.float32)
    )
    assert out_f32.shape == (batch, out_features)
    assert jnp.allclose(out_f32, ref, atol=1e-5, rtol=1e-5), float(
        jnp.max(jnp.abs(out_f32 - ref))
    )

    # Default bf16 MXU path: looser tolerance (cosine values are in [-1, 1]).
    out_bf16 = jax.block_until_ready(normed_linear(x, weight))
    assert jnp.allclose(out_bf16, ref, atol=2e-2, rtol=2e-2), float(
        jnp.max(jnp.abs(out_bf16 - ref))
    )

    # Case 2: non-aligned shapes exercising padding + multi-tile grid.
    M2, K2, N2 = 40, 50, 384
    x2 = jax.random.normal(k_x2, (M2, K2), dtype=jnp.float32)
    w2 = jax.random.normal(k_w2, (K2, N2), dtype=jnp.float32)
    ref2 = normed_linear_ref(x2, w2)
    out2 = jax.block_until_ready(
        normed_linear(x2, w2, tm_target=16, tn_target=128)
    )
    assert out2.shape == (M2, N2)
    assert jnp.allclose(out2, ref2, atol=2e-2, rtol=2e-2), float(
        jnp.max(jnp.abs(out2 - ref2))
    )

    print("KERNEL_OK")
</pallas_src>

<mosaic_0001>
module attributes {stable_mosaic.version = 11 : i64} {
  func.func @_normed_linear_kernel(%arg0: i32, %arg1: i32, %arg2: memref<8x128xf32, #tpu.memory_space<vmem>>, %arg3: memref<128x128xf32, #tpu.memory_space<vmem>>, %arg4: memref<8x128xf32, #tpu.memory_space<vmem>>) attributes {dimension_semantics = [#tpu.dimension_semantics<parallel>, #tpu.dimension_semantics<parallel>], iteration_bounds = array<i64: 1, 1>, scalar_prefetch = 0 : i64, scratch_operands = 0 : i64, tpu.core_type = #tpu.core_type<tc>, window_params = [{transform_indices = @transform_0, window_bounds = array<i64: 8, 128>}, {transform_indices = @transform_1, window_bounds = array<i64: 128, 128>}, {transform_indices = @transform_2, window_bounds = array<i64: 8, 128>}]} {
    %c0 = arith.constant 0 : index
    %c0_0 = arith.constant 0 : index
    %0 = vector.load %arg2[%c0, %c0_0] : memref<8x128xf32, #tpu.memory_space<vmem>>, vector<8x128xf32>
    %c0_1 = arith.constant 0 : index
    %c0_2 = arith.constant 0 : index
    %1 = vector.load %arg3[%c0_1, %c0_2] : memref<128x128xf32, #tpu.memory_space<vmem>>, vector<128x128xf32>
    %2 = arith.mulf %0, %0 : vector<8x128xf32>
    %cst = arith.constant dense<0.000000e+00> : vector<8xf32>
    %3 = vector.multi_reduction <add>, %2, %cst [1] : vector<8x128xf32> to vector<8xf32>
    %4 = vector.shape_cast %3 : vector<8xf32> to vector<8x1xf32>
    %cst_3 = arith.constant 1.000000e-24 : f32
    %5 = vector.broadcast %cst_3 : f32 to vector<8x1xf32>
    %6 = arith.maximumf %4, %5 : vector<8x1xf32>
    %7 = math.rsqrt %6 : vector<8x1xf32>
    %8 = arith.mulf %1, %1 : vector<128x128xf32>
    %cst_4 = arith.constant dense<0.000000e+00> : vector<128xf32>
    %9 = vector.multi_reduction <add>, %8, %cst_4 [0] : vector<128x128xf32> to vector<128xf32>
    %10 = vector.shape_cast %9 : vector<128xf32> to vector<1x128xf32>
    %cst_5 = arith.constant 1.000000e-24 : f32
    %11 = vector.broadcast %cst_5 : f32 to vector<1x128xf32>
    %12 = arith.maximumf %10, %11 : vector<1x128xf32>
    %13 = math.rsqrt %12 : vector<1x128xf32>
    %14 = vector.broadcast %7 : vector<8x1xf32> to vector<8x128xf32>
    %15 = arith.mulf %0, %14 : vector<8x128xf32>
    %16 = vector.broadcast %13 : vector<1x128xf32> to vector<128x128xf32>
    %17 = arith.mulf %1, %16 : vector<128x128xf32>
    %cst_6 = arith.constant dense<0.000000e+00> : vector<8x128xf32>
    %18 = tpu.matmul %15, %17, %cst_6 {dimension_numbers = #tpu.dot_dimension_numbers<[1], [0], [0], [1], [0, 0, 1, 1], [], []>} : vector<8x128xf32>, vector<128x128xf32>, vector<8x128xf32> -> vector<8x128xf32>
    %c0_7 = arith.constant 0 : index
    %c0_8 = arith.constant 0 : index
    %19 = vector.load %arg4[%c0_7, %c0_8] : memref<8x128xf32, #tpu.memory_space<vmem>>, vector<8x128xf32>
    tpu.vector_store %arg4[%c0_7, %c0_8], %18 {strides = array<i32>} : memref<8x128xf32, #tpu.memory_space<vmem>>, vector<8x128xf32>,
    return
  }
  func.func @transform_0(%arg0: i32, %arg1: i32) -> (i32, i32) {
    %c0_i32 = arith.constant 0 : i32
    %c0_i32_0 = arith.constant 0 : i32
    return %arg0, %c0_i32 : i32, i32
  }
  func.func @transform_1(%arg0: i32, %arg1: i32) -> (i32, i32) {
    %c0_i32 = arith.constant 0 : i32
    %c0_i32_0 = arith.constant 0 : i32
    return %c0_i32, %arg1 : i32, i32
  }
  func.func @transform_2(%arg0: i32, %arg1: i32) -> (i32, i32) {
    %c0_i32 = arith.constant 0 : i32
    return %arg0, %arg1 : i32, i32
  }
}

</mosaic_0001>

<llo_original>
// kernel: tpu_custom_call.1
$region0: #{tpu_custom_call.1}
  #allocation0 [shape = 'u32[]', space=smem, size = 0x4, offset = 0x4, fixed_abs, tag = 'smem constant byte address 0x4 - core index']
  #allocation1 [shape = 'u32[144,128]{1,0:T(1,128)}', space=vmem, size = 0x12000, scoped, tag = 'internal scratch']
  %s0 = inlined_call_operand.hbm [shape: f32[8,128], index: 0, kind: input, shape index: {}]
  %s1 = inlined_call_operand.hbm [shape: f32[128,128], index: 1, kind: input, shape index: {}]
  %s2 = inlined_call_operand.hbm [shape: f32[8,128], index: 2, kind: output, shape index: {}]
  %s3 = sld [smem:[#allocation0]]
  $region26: #{tpu_custom_call.1} parent=0
    _
  %s5 = ssub.s32 1, %s3
  %s6 = scalar_select 0, %s5, %s3
  $region1: #{tpu_custom_call.1} parent=0
    #allocation2 [shape = 'u8[4096]{0}', space=vmem, size = 0x1000, scoped, tag = 'input window, operand 0, single buffered']
    #allocation3 [shape = 's32[1]{0}', space=sflag, size = 0x4, scoped, tag = 'scoped memory for tpu_custom_call.1']
    #allocation4 [shape = 's32[1]{0}', space=sflag, size = 0x4, scoped, tag = 'scoped memory for tpu_custom_call.1']
    #allocation5 [shape = 'u8[65536]{0}', space=vmem, size = 0x10000, scoped, tag = 'input window, operand 1, single buffered']
    #allocation6 [shape = 's32[1]{0}', space=sflag, size = 0x4, scoped, tag = 'scoped memory for tpu_custom_call.1']
    #allocation7 [shape = 'u8[4096]{0}', space=vmem, size = 0x1000, scoped, tag = 'output window, operand 0, single buffered']
    %7 = vsyncpa [#allocation3], 0
    %8 = vsyncpa [#allocation6], 0
    %9 = vsyncpa [#allocation4], 0
    // Predicated region
    $region2: #{tpu_custom_call.1} parent=1 // pred_check
      _
    $region3: #{tpu_custom_call.1} parent=1 // pred_check_branch
      %11 = sbr.rel (0) target = $region5
    $region4: #{tpu_custom_call.1} parent=1 // pred_region
      %s13 = ssub.s32 128, 128
      %14 = vsyncadd [#allocation3], %s13
      %s16 = sshll.u32 [#allocation2], 4
      %s17 = int_to_ptr.vmem [resolvable:$true] %s16
      %19 = dma.hbm_to_vmem [thread:$0]  %s0, 128, %s17, [#allocation3]
    $region5: #{tpu_custom_call.1} parent=1 // pred_fallthru
      _
    // Predicated region
    $region6: #{tpu_custom_call.1} parent=1 // pred_check
      _
    $region7: #{tpu_custom_call.1} parent=1 // pred_check_branch
      %21 = sbr.rel (0) target = $region9
    $region8: #{tpu_custom_call.1} parent=1 // pred_region
      %s23 = ssub.s32 2048, 2048
      %24 = vsyncadd [#allocation6], %s23
      %s25 = sshll.u32 [#allocation5], 4
      %s26 = int_to_ptr.vmem [resolvable:$true] %s25
      %31 = dma.hbm_to_vmem [thread:$0]  %s1, 2048, %s26, [#allocation6], 128, 128, 8
    $region9: #{tpu_custom_call.1} parent=1 // pred_fallthru
      _
    // Predicated region
    $region10: #{tpu_custom_call.1} parent=1 // pred_check
      _
    $region11: #{tpu_custom_call.1} parent=1 // pred_check_branch
      %33 = sbr.rel (0) target = $region13
    $region12: #{tpu_custom_call.1} parent=1 // pred_region
      %34 = dma.done [#allocation3], 128
    $region13: #{tpu_custom_call.1} parent=1 // pred_fallthru
      _
    // Predicated region
    $region14: #{tpu_custom_call.1} parent=1 // pred_check
      _
    $region15: #{tpu_custom_call.1} parent=1 // pred_check_branch
      %36 = sbr.rel (0) target = $region17
    $region16: #{tpu_custom_call.1} parent=1 // pred_region
      %37 = dma.done [#allocation6], 2048
    $region17: #{tpu_custom_call.1} parent=1 // pred_fallthru
      _
    %v38 = vld [vmem:[#allocation2] sm:$0xff]
    %v39 = vld [vmem:[#allocation5] sm:$0xff]
    %v40 = vld [vmem:[#allocation5 + $0x8] sm:$0xff]
    %v41 = vld [vmem:[#allocation5 + $0x10] sm:$0xff]
    %v42 = vld [vmem:[#allocation5 + $0x18] sm:$0xff]
    %v43 = vld [vmem:[#allocation5 + $0x20] sm:$0xff]
    %v44 = vld [vmem:[#allocation5 + $0x28] sm:$0xff]
    %v45 = vld [vmem:[#allocation5 + $0x30] sm:$0xff]
    %v46 = vld [vmem:[#allocation5 + $0x38] sm:$0xff]
    %v47 = vld [vmem:[#allocation5 + $0x40] sm:$0xff]
    %v48 = vld [vmem:[#allocation5 + $0x48] sm:$0xff]
    %v49 = vld [vmem:[#allocation5 + $0x50] sm:$0xff]
    %v50 = vld [vmem:[#allocation5 + $0x58] sm:$0xff]
    %v51 = vld [vmem:[#allocation5 + $0x60] sm:$0xff]
    %v52 = vld [vmem:[#allocation5 + $0x68] sm:$0xff]
    %v53 = vld [vmem:[#allocation5 + $0x70] sm:$0xff]
    %v54 = vld [vmem:[#allocation5 + $0x78] sm:$0xff]
    %v55 = vmul.f32 %v38, %v38
    %56 = vadd.xlane.f32.xlu0 %v55
    %v57 = vpop.xlane.xlu0 %56
    %v58 = vmax.f32 %v57, 1e-24
    %v59 = vrsqrt.pop %v58
    %v60 = vmul.f32 %v39, %v39
    %v61 = vmul.f32 %v40, %v40
    %v62 = vmul.f32 %v41, %v41
    %v63 = vmul.f32 %v42, %v42
    %v64 = vmul.f32 %v43, %v43
    %v65 = vmul.f32 %v44, %v44
    %v66 = vmul.f32 %v45, %v45
    %v67 = vmul.f32 %v46, %v46
    %v68 = vmul.f32 %v47, %v47
    %v69 = vmul.f32 %v48, %v48
    %v70 = vmul.f32 %v49, %v49
    %v71 = vmul.f32 %v50, %v50
    %v72 = vmul.f32 %v51, %v51
    %v73 = vmul.f32 %v52, %v52
    %v74 = vmul.f32 %v53, %v53
    %v75 = vmul.f32 %v54, %v54
    %v76 = vadd.f32 %v60, %v61
    %v77 = vadd.f32 %v76, %v62
    %v78 = vadd.f32 %v77, %v63
    %v79 = vadd.f32 %v78, %v64
    %v80 = vadd.f32 %v79, %v65
    %v81 = vadd.f32 %v80, %v66
    %v82 = vadd.f32 %v81, %v67
    %v83 = vadd.f32 %v82, %v68
    %v84 = vadd.f32 %v83, %v69
    %v85 = vadd.f32 %v84, %v70
    %v86 = vadd.f32 %v85, %v71
    %v87 = vadd.f32 %v86, %v72
    %v88 = vadd.f32 %v87, %v73
    %v89 = vadd.f32 %v88, %v74
    %v90 = vadd.f32 %v89, %v75
    %v91 = vrot.slane %v90, 4
    %v92 = vadd.f32 %v90, %v91
    %v93 = vrot.slane %v92, 2
    %v94 = vadd.f32 %v92, %v93
    %v95 = vrot.slane %v94, 1
    %v96 = vadd.f32 %v94, %v95
    %v97 = vmax.f32 %v96, 1e-24
    %v98 = vrsqrt.pop %v97
    %v99 = vmul.f32 %v38, %v59
    %v100 = vmul.f32 %v39, %v98
    %v101 = vmul.f32 %v40, %v98
    %v102 = vmul.f32 %v41, %v98
    %v103 = vmul.f32 %v42, %v98
    %v104 = vmul.f32 %v43, %v98
    %v105 = vmul.f32 %v44, %v98
    %v106 = vmul.f32 %v45, %v98
    %v107 = vmul.f32 %v46, %v98
    %v108 = vmul.f32 %v47, %v98
    %v109 = vmul.f32 %v48, %v98
    %v110 = vmul.f32 %v49, %v98
    %v111 = vmul.f32 %v50, %v98
    %v112 = vmul.f32 %v51, %v98
    %v113 = vmul.f32 %v52, %v98
    %v114 = vmul.f32 %v53, %v98
    %v115 = vmul.f32 %v54, %v98
    %116 = vmatprep.subr.mxu0 0.0
    %117 = vmatpush1.msra.mxu0 %v115
    %118 = vmatprep.subr.mxu0 0.0
    %119 = vmatpush1.msra.mxu0 %v114
    %120 = vmatprep.subr.mxu0 0.0
    %121 = vmatpush1.msra.mxu0 %v113
    %122 = vmatprep.subr.mxu0 0.0
    %123 = vmatpush1.msra.mxu0 %v112
    %124 = vmatprep.subr.mxu0 0.0
    %125 = vmatpush1.msra.mxu0 %v111
    %126 = vmatprep.subr.mxu0 0.0
    %127 = vmatpush1.msra.mxu0 %v110
    %128 = vmatprep.subr.mxu0 0.0
    %129 = vmatpush1.msra.mxu0 %v109
    %130 = vmatprep.subr.mxu0 0.0
    %131 = vmatpush1.msra.mxu0 %v108
    %132 = vmatprep.subr.mxu0 0.0
    %133 = vmatpush1.msra.mxu0 %v107
    %134 = vmatprep.subr.mxu0 0.0
    %135 = vmatpush1.msra.mxu0 %v106
    %136 = vmatprep.subr.mxu0 0.0
    %137 = vmatpush1.msra.mxu0 %v105
    %138 = vmatprep.subr.mxu0 0.0
    %139 = vmatpush1.msra.mxu0 %v104
    %140 = vmatprep.subr.mxu0 0.0
    %141 = vmatpush1.msra.mxu0 %v103
    %142 = vmatprep.subr.mxu0 0.0
    %143 = vmatpush1.msra.mxu0 %v102
    %144 = vmatprep.subr.mxu0 0.0
    %145 = vmatpush1.msra.mxu0 %v101
    %146 = vmatprep.subr.mxu0 0.0
    %147 = vmatpush1.msra.mxu0 %v100
    %148 = vmatprep.subr.mxu0 0.0
    %149 = vmatpush2.msra.mxu0 0.0
    %150 = vmatprep.subr.mxu0 0.0
    %151 = vmatpush2.msra.mxu0 0.0
    %152 = vmatprep.subr.mxu0 0.0
    %153 = vmatpush2.msra.mxu0 0.0
    %154 = vmatprep.subr.mxu0 0.0
    %155 = vmatpush2.msra.mxu0 0.0
    %156 = vmatprep.subr.mxu0 0.0
    %157 = vmatpush2.msra.mxu0 0.0
    %158 = vmatprep.subr.mxu0 0.0
    %159 = vmatpush2.msra.mxu0 0.0
    %160 = vmatprep.subr.mxu0 0.0
    %161 = vmatpush2.msra.mxu0 0.0
    %162 = vmatprep.subr.mxu0 0.0
    %163 = vmatpush2.msra.mxu0 0.0
    %164 = vmatprep.subr.mxu0 0.0
    %165 = vmatpush2.msra.mxu0 0.0
    %166 = vmatprep.subr.mxu0 0.0
    %167 = vmatpush2.msra.mxu0 0.0
    %168 = vmatprep.subr.mxu0 0.0
    %169 = vmatpush2.msra.mxu0 0.0
    %170 = vmatprep.subr.mxu0 0.0
    %171 = vmatpush2.msra.mxu0 0.0
    %172 = vmatprep.subr.mxu0 0.0
    %173 = vmatpush2.msra.mxu0 0.0
    %174 = vmatprep.subr.mxu0 0.0
    %175 = vmatpush2.msra.mxu0 0.0
    %176 = vmatprep.subr.mxu0 0.0
    %177 = vmatpush2.msra.mxu0 0.0
    %178 = vmatprep.subr.mxu0 0.0
    %179 = vmatpush2.msra.mxu0 0.0
    %180 = vmatprep.mubr.f32.mxu0 0.0
    %181 = vmatmul.mubr.f32.gmra.mxu0 %v99
    %v182 = vpop.f32.mrf.mxu0
    %v183 = vadd.f32 0.0, %v182
    %v184 = vpop.f32.mrf.mxu0
    %185 = vdwg.mxu0
    %186 = vst [vmem:[#allocation7] sm:$0xff] %v183
    // Predicated region
    $region18: #{tpu_custom_call.1} parent=1 // pred_check
      _
    $region19: #{tpu_custom_call.1} parent=1 // pred_check_branch
      %188 = sbr.rel (0) target = $region21
    $region20: #{tpu_custom_call.1} parent=1 // pred_region
      %s190 = ssub.s32 128, 128
      %191 = vsyncadd [#allocation4], %s190
      %s193 = sshll.u32 [#allocation7], 4
      %s194 = int_to_ptr.vmem [resolvable:$true] %s193
      %196 = dma.vmem_to_hbm [thread:$0]  %s194, 128, %s2, [#allocation4]
    $region21: #{tpu_custom_call.1} parent=1 // pred_fallthru
      _
    // Predicated region
    $region22: #{tpu_custom_call.1} parent=1 // pred_check
      _
    $region23: #{tpu_custom_call.1} parent=1 // pred_check_branch
      %198 = sbr.rel (0) target = $region25
    $region24: #{tpu_custom_call.1} parent=1 // pred_region
      %199 = dma.done [#allocation4], 128
    $region25: #{tpu_custom_call.1} parent=1 // pred_fallthru
      _
    %200 = vsyncpa [#allocation3], 1
    %201 = vsyncpa [#allocation6], 1
    %202 = vsyncpa [#allocation4], 1

</llo_original>
